<compile_context>
chip_gen: v6e
topology: v6e:2x2x1
jax: 0.10.0
libtpu: 0.0.40
codegen_flags: <defaults>
</compile_context>

<pallas_src>
import functools

import jax
import jax.numpy as jnp
from jax.experimental import pallas as pl
from jax.experimental.pallas import tpu as pltpu


def _round_up(x: int, m: int) -> int:
    return (x + m - 1) // m * m


def actor_kernel(x_ref,
                 w1_ref, b1_ref,
                 w2_ref, b2_ref,
                 w3_ref, b3_ref,
                 w4_ref, b4_ref,
                 out_ref):
    # State tile [TB, Sp] (f32). Cast matmul operands to bf16, accumulate f32,
    # keep all elementwise activation math in f32 (v5e-safe).
    x = x_ref[...]

    # Layer 1: Linear + ReLU
    h = jnp.dot(x.astype(jnp.bfloat16), w1_ref[...],
                preferred_element_type=jnp.float32) + b1_ref[...]
    h = jnp.maximum(h, 0.0)

    # Layer 2: Linear + ReLU
    h = jnp.dot(h.astype(jnp.bfloat16), w2_ref[...],
                preferred_element_type=jnp.float32) + b2_ref[...]
    h = jnp.maximum(h, 0.0)

    # Layer 3: Linear + Hardswish  (hardswish(z) = z * clip(z + 3, 0, 6) / 6)
    z = jnp.dot(h.astype(jnp.bfloat16), w3_ref[...],
                preferred_element_type=jnp.float32) + b3_ref[...]
    h = z * jnp.clip(z + 3.0, 0.0, 6.0) * (1.0 / 6.0)

    # Layer 4: Linear + tanh
    y = jnp.dot(h.astype(jnp.bfloat16), w4_ref[...],
                preferred_element_type=jnp.float32) + b4_ref[...]
    out_ref[...] = jnp.tanh(y)


def init_actor_params(key, state_dim, mid_dim, action_dim):
    """Deterministic init mimicking PyTorch nn.Linear default:
    U(-1/sqrt(fan_in), 1/sqrt(fan_in)) for both weight and bias.
    Weights stored as [in, out] (PyTorch weight transposed), biases as [1, out]."""
    dims = [(state_dim, mid_dim), (mid_dim, mid_dim),
            (mid_dim, mid_dim), (mid_dim, action_dim)]
    params = []
    for (fan_in, fan_out) in dims:
        key, kw, kb = jax.random.split(key, 3)
        bound = 1.0 / jnp.sqrt(float(fan_in))
        w = jax.random.uniform(kw, (fan_in, fan_out), jnp.float32, -bound, bound)
        b = jax.random.uniform(kb, (1, fan_out), jnp.float32, -bound, bound)
        params.append((w, b))
    return params


def _pad_w_bf16(w, rows_p, cols_p):
    """Zero-pad weight to [rows_p, cols_p] and cast to bf16 (MXU operand)."""
    return jnp.pad(w, ((0, rows_p - w.shape[0]),
                       (0, cols_p - w.shape[1]))).astype(jnp.bfloat16)


def _pad_b_f32(b, cols_p):
    """Zero-pad bias to [1, cols_p], keep f32 (added post-accumulation)."""
    return jnp.pad(b, ((0, 0), (0, cols_p - b.shape[1]))).astype(jnp.float32)


@functools.partial(jax.jit, static_argnames=("tb_max",))
def actor_forward(state, params, *, tb_max=512):
    """state: [B, state_dim] float32 -> actions in [-1, 1], shape [B, action_dim]."""
    (w1, b1), (w2, b2), (w3, b3), (w4, b4) = params
    B, state_dim = state.shape
    mid_dim = w1.shape[1]
    action_dim = w4.shape[1]

    # Lane-dense padded feature dims (multiples of 128).
    Sp = _round_up(state_dim, 128)
    Mp = _round_up(mid_dim, 128)
    Ap = _round_up(action_dim, 128)

    # Batch tile: multiple of 8 (f32 sublane), capped at tb_max; pad B up to a
    # multiple of TB so the grid covers the batch exactly. Padded rows are
    # zeros and are sliced off afterwards.
    TB = min(tb_max, _round_up(B, 8))
    Bp = _round_up(B, TB)

    xp = jnp.pad(state.astype(jnp.float32),
                 ((0, Bp - B), (0, Sp - state_dim)))

    w1p, b1p = _pad_w_bf16(w1, Sp, Mp), _pad_b_f32(b1, Mp)
    w2p, b2p = _pad_w_bf16(w2, Mp, Mp), _pad_b_f32(b2, Mp)
    w3p, b3p = _pad_w_bf16(w3, Mp, Mp), _pad_b_f32(b3, Mp)
    w4p, b4p = _pad_w_bf16(w4, Mp, Ap), _pad_b_f32(b4, Ap)

    grid = (Bp // TB,)

    # Advisory cost hint for XLA scheduling around the custom call.
    flops = 2 * Bp * (Sp * Mp + Mp * Mp + Mp * Mp + Mp * Ap)
    bytes_accessed = (
        Bp * Sp * 4 + Bp * Ap * 4                       # state in, action out
        + 2 * ((Sp * Mp + 2 * Mp * Mp + Mp * Ap)        # bf16 weights
               + 0)
        + 4 * (3 * Mp + Ap)                             # f32 biases
    )
    cost = pl.CostEstimate(flops=flops,
                           transcendentals=Bp * Ap,      # tanh epilogue
                           bytes_accessed=bytes_accessed)

    out_padded = pl.pallas_call(
        actor_kernel,
        out_shape=jax.ShapeDtypeStruct((Bp, Ap), jnp.float32),
        grid=grid,
        in_specs=[
            pl.BlockSpec((TB, Sp), lambda i: (i, 0)),   # state: tiled over batch
            pl.BlockSpec((Sp, Mp), lambda i: (0, 0)),   # w1: VMEM-resident
            pl.BlockSpec((1, Mp), lambda i: (0, 0)),    # b1
            pl.BlockSpec((Mp, Mp), lambda i: (0, 0)),   # w2
            pl.BlockSpec((1, Mp), lambda i: (0, 0)),    # b2
            pl.BlockSpec((Mp, Mp), lambda i: (0, 0)),   # w3
            pl.BlockSpec((1, Mp), lambda i: (0, 0)),    # b3
            pl.BlockSpec((Mp, Ap), lambda i: (0, 0)),   # w4
            pl.BlockSpec((1, Ap), lambda i: (0, 0)),    # b4
        ],
        out_specs=pl.BlockSpec((TB, Ap), lambda i: (i, 0)),
        compiler_params=pltpu.CompilerParams(
            dimension_semantics=("parallel",)),
        cost_estimate=cost,
    )(xp, w1p, b1p, w2p, b2p, w3p, b3p, w4p, b4p)

    return out_padded[:B, :action_dim]


def actor_forward_ref(state, params):
    """Pure-JAX f32 reference for correctness checking."""
    (w1, b1), (w2, b2), (w3, b3), (w4, b4) = params
    h = jnp.maximum(state @ w1 + b1, 0.0)
    h = jnp.maximum(h @ w2 + b2, 0.0)
    z = h @ w3 + b3
    h = z * jnp.clip(z + 3.0, 0.0, 6.0) / 6.0
    return jnp.tanh(h @ w4 + b4)


if __name__ == "__main__":
    # Small shapes consistent with the module's forward.
    B, state_dim, mid_dim, action_dim = 8, 16, 32, 4

    key = jax.random.PRNGKey(0)
    key, k_state = jax.random.split(key)
    state = jax.random.normal(k_state, (B, state_dim), jnp.float32)

    params = init_actor_params(key, state_dim, mid_dim, action_dim)

    out = actor_forward(state, params)
    out = jax.block_until_ready(out)

    ref = actor_forward_ref(state, params)
    assert out.shape == (B, action_dim)
    # bf16 matmul operands (f32 accumulate) -> relaxed tolerance vs f32 ref.
    assert jnp.allclose(out, ref, atol=2e-2, rtol=2e-2), "mismatch vs reference"
    assert jnp.all(jnp.abs(out) <= 1.0), "tanh range violated"

    # TODO(synk): get_action() exploration noise (randn * std, clamp) is left to
    # the host-side wrapper; only the deterministic forward() is kernelized.
    print("KERNEL_OK")
</pallas_src>

<mosaic_0001>
module attributes {stable_mosaic.version = 11 : i64} {
  func.func @actor_kernel(%arg0: i32, %arg1: memref<8x128xf32, #tpu.memory_space<vmem>>, %arg2: memref<128x128xbf16, #tpu.memory_space<vmem>>, %arg3: memref<1x128xf32, #tpu.memory_space<vmem>>, %arg4: memref<128x128xbf16, #tpu.memory_space<vmem>>, %arg5: memref<1x128xf32, #tpu.memory_space<vmem>>, %arg6: memref<128x128xbf16, #tpu.memory_space<vmem>>, %arg7: memref<1x128xf32, #tpu.memory_space<vmem>>, %arg8: memref<128x128xbf16, #tpu.memory_space<vmem>>, %arg9: memref<1x128xf32, #tpu.memory_space<vmem>>, %arg10: memref<8x128xf32, #tpu.memory_space<vmem>>) attributes {dimension_semantics = [#tpu.dimension_semantics<parallel>], iteration_bounds = array<i64: 1>, scalar_prefetch = 0 : i64, scratch_operands = 0 : i64, tpu.core_type = #tpu.core_type<tc>, window_params = [{transform_indices = @transform_0, window_bounds = array<i64: 8, 128>}, {pipeline_mode = #tpu.pipeline_mode<synchronous>, transform_indices = @transform_1, window_bounds = array<i64: 128, 128>}, {pipeline_mode = #tpu.pipeline_mode<synchronous>, transform_indices = @transform_2, window_bounds = array<i64: 1, 128>}, {pipeline_mode = #tpu.pipeline_mode<synchronous>, transform_indices = @transform_3, window_bounds = array<i64: 128, 128>}, {pipeline_mode = #tpu.pipeline_mode<synchronous>, transform_indices = @transform_4, window_bounds = array<i64: 1, 128>}, {pipeline_mode = #tpu.pipeline_mode<synchronous>, transform_indices = @transform_5, window_bounds = array<i64: 128, 128>}, {pipeline_mode = #tpu.pipeline_mode<synchronous>, transform_indices = @transform_6, window_bounds = array<i64: 1, 128>}, {pipeline_mode = #tpu.pipeline_mode<synchronous>, transform_indices = @transform_7, window_bounds = array<i64: 128, 128>}, {pipeline_mode = #tpu.pipeline_mode<synchronous>, transform_indices = @transform_8, window_bounds = array<i64: 1, 128>}, {transform_indices = @transform_9, window_bounds = array<i64: 8, 128>}]} {
    %c0 = arith.constant 0 : index
    %c0_0 = arith.constant 0 : index
    %0 = vector.load %arg1[%c0, %c0_0] : memref<8x128xf32, #tpu.memory_space<vmem>>, vector<8x128xf32>
    %1 = arith.truncf %0 : vector<8x128xf32> to vector<8x128xbf16>
    %c0_1 = arith.constant 0 : index
    %c0_2 = arith.constant 0 : index
    %2 = vector.load %arg2[%c0_1, %c0_2] : memref<128x128xbf16, #tpu.memory_space<vmem>>, vector<128x128xbf16>
    %cst = arith.constant dense<0.000000e+00> : vector<8x128xf32>
    %3 = tpu.matmul %1, %2, %cst {dimension_numbers = #tpu.dot_dimension_numbers<[1], [0], [0], [1], [0, 0, 1, 1], [], []>} : vector<8x128xbf16>, vector<128x128xbf16>, vector<8x128xf32> -> vector<8x128xf32>
    %c0_3 = arith.constant 0 : index
    %c0_4 = arith.constant 0 : index
    %4 = vector.load %arg3[%c0_3, %c0_4] : memref<1x128xf32, #tpu.memory_space<vmem>>, vector<1x128xf32>
    %5 = vector.broadcast %4 : vector<1x128xf32> to vector<8x128xf32>
    %6 = arith.addf %3, %5 : vector<8x128xf32>
    %cst_5 = arith.constant 0.000000e+00 : f32
    %7 = vector.broadcast %cst_5 : f32 to vector<8x128xf32>
    %8 = arith.maximumf %6, %7 : vector<8x128xf32>
    %9 = arith.truncf %8 : vector<8x128xf32> to vector<8x128xbf16>
    %c0_6 = arith.constant 0 : index
    %c0_7 = arith.constant 0 : index
    %10 = vector.load %arg4[%c0_6, %c0_7] : memref<128x128xbf16, #tpu.memory_space<vmem>>, vector<128x128xbf16>
    %cst_8 = arith.constant dense<0.000000e+00> : vector<8x128xf32>
    %11 = tpu.matmul %9, %10, %cst_8 {dimension_numbers = #tpu.dot_dimension_numbers<[1], [0], [0], [1], [0, 0, 1, 1], [], []>} : vector<8x128xbf16>, vector<128x128xbf16>, vector<8x128xf32> -> vector<8x128xf32>
    %c0_9 = arith.constant 0 : index
    %c0_10 = arith.constant 0 : index
    %12 = vector.load %arg5[%c0_9, %c0_10] : memref<1x128xf32, #tpu.memory_space<vmem>>, vector<1x128xf32>
    %13 = vector.broadcast %12 : vector<1x128xf32> to vector<8x128xf32>
    %14 = arith.addf %11, %13 : vector<8x128xf32>
    %cst_11 = arith.constant 0.000000e+00 : f32
    %15 = vector.broadcast %cst_11 : f32 to vector<8x128xf32>
    %16 = arith.maximumf %14, %15 : vector<8x128xf32>
    %17 = arith.truncf %16 : vector<8x128xf32> to vector<8x128xbf16>
    %c0_12 = arith.constant 0 : index
    %c0_13 = arith.constant 0 : index
    %18 = vector.load %arg6[%c0_12, %c0_13] : memref<128x128xbf16, #tpu.memory_space<vmem>>, vector<128x128xbf16>
    %cst_14 = arith.constant dense<0.000000e+00> : vector<8x128xf32>
    %19 = tpu.matmul %17, %18, %cst_14 {dimension_numbers = #tpu.dot_dimension_numbers<[1], [0], [0], [1], [0, 0, 1, 1], [], []>} : vector<8x128xbf16>, vector<128x128xbf16>, vector<8x128xf32> -> vector<8x128xf32>
    %c0_15 = arith.constant 0 : index
    %c0_16 = arith.constant 0 : index
    %20 = vector.load %arg7[%c0_15, %c0_16] : memref<1x128xf32, #tpu.memory_space<vmem>>, vector<1x128xf32>
    %21 = vector.broadcast %20 : vector<1x128xf32> to vector<8x128xf32>
    %22 = arith.addf %19, %21 : vector<8x128xf32>
    %cst_17 = arith.constant 3.000000e+00 : f32
    %23 = vector.broadcast %cst_17 : f32 to vector<8x128xf32>
    %24 = arith.addf %22, %23 : vector<8x128xf32>
    %cst_18 = arith.constant 0.000000e+00 : f32
    %cst_19 = arith.constant 6.000000e+00 : f32
    %25 = vector.broadcast %cst_18 : f32 to vector<8x128xf32>
    %26 = arith.maximumf %25, %24 : vector<8x128xf32>
    %27 = vector.broadcast %cst_19 : f32 to vector<8x128xf32>
    %28 = arith.minimumf %27, %26 : vector<8x128xf32>
    %29 = arith.mulf %22, %28 : vector<8x128xf32>
    %cst_20 = arith.constant 0.166666672 : f32
    %30 = vector.broadcast %cst_20 : f32 to vector<8x128xf32>
    %31 = arith.mulf %29, %30 : vector<8x128xf32>
    %32 = arith.truncf %31 : vector<8x128xf32> to vector<8x128xbf16>
    %c0_21 = arith.constant 0 : index
    %c0_22 = arith.constant 0 : index
    %33 = vector.load %arg8[%c0_21, %c0_22] : memref<128x128xbf16, #tpu.memory_space<vmem>>, vector<128x128xbf16>
    %cst_23 = arith.constant dense<0.000000e+00> : vector<8x128xf32>
    %34 = tpu.matmul %32, %33, %cst_23 {dimension_numbers = #tpu.dot_dimension_numbers<[1], [0], [0], [1], [0, 0, 1, 1], [], []>} : vector<8x128xbf16>, vector<128x128xbf16>, vector<8x128xf32> -> vector<8x128xf32>
    %c0_24 = arith.constant 0 : index
    %c0_25 = arith.constant 0 : index
    %35 = vector.load %arg9[%c0_24, %c0_25] : memref<1x128xf32, #tpu.memory_space<vmem>>, vector<1x128xf32>
    %36 = vector.broadcast %35 : vector<1x128xf32> to vector<8x128xf32>
    %37 = arith.addf %34, %36 : vector<8x128xf32>
    %38 = math.tanh %37 : vector<8x128xf32>
    %c0_26 = arith.constant 0 : index
    %c0_27 = arith.constant 0 : index
    %39 = vector.load %arg10[%c0_26, %c0_27] : memref<8x128xf32, #tpu.memory_space<vmem>>, vector<8x128xf32>
    tpu.vector_store %arg10[%c0_26, %c0_27], %38 {strides = array<i32>} : memref<8x128xf32, #tpu.memory_space<vmem>>, vector<8x128xf32>,
    return
  }
  func.func @transform_0(%arg0: i32) -> (i32, i32) {
    %c0_i32 = arith.constant 0 : i32
    %c0_i32_0 = arith.constant 0 : i32
    return %arg0, %c0_i32 : i32, i32
  }
  func.func @transform_1(%arg0: i32) -> (i32, i32) {
    %c0_i32 = arith.constant 0 : i32
    %c0_i32_0 = arith.constant 0 : i32
    %c0_i32_1 = arith.constant 0 : i32
    return %c0_i32, %c0_i32_0 : i32, i32
  }
  func.func @transform_2(%arg0: i32) -> (i32, i32) {
    %c0_i32 = arith.constant 0 : i32
    %c0_i32_0 = arith.constant 0 : i32
    %c0_i32_1 = arith.constant 0 : i32
    return %c0_i32, %c0_i32_0 : i32, i32
  }
  func.func @transform_3(%arg0: i32) -> (i32, i32) {
    %c0_i32 = arith.constant 0 : i32
    %c0_i32_0 = arith.constant 0 : i32
    %c0_i32_1 = arith.constant 0 : i32
    return %c0_i32, %c0_i32_0 : i32, i32
  }
  func.func @transform_4(%arg0: i32) -> (i32, i32) {
    %c0_i32 = arith.constant 0 : i32
    %c0_i32_0 = arith.constant 0 : i32
    %c0_i32_1 = arith.constant 0 : i32
    return %c0_i32, %c0_i32_0 : i32, i32
  }
  func.func @transform_5(%arg0: i32) -> (i32, i32) {
    %c0_i32 = arith.constant 0 : i32
    %c0_i32_0 = arith.constant 0 : i32
    %c0_i32_1 = arith.constant 0 : i32
    return %c0_i32, %c0_i32_0 : i32, i32
  }
  func.func @transform_6(%arg0: i32) -> (i32, i32) {
    %c0_i32 = arith.constant 0 : i32
    %c0_i32_0 = arith.constant 0 : i32
    %c0_i32_1 = arith.constant 0 : i32
    return %c0_i32, %c0_i32_0 : i32, i32
  }
  func.func @transform_7(%arg0: i32) -> (i32, i32) {
    %c0_i32 = arith.constant 0 : i32
    %c0_i32_0 = arith.constant 0 : i32
    %c0_i32_1 = arith.constant 0 : i32
    return %c0_i32, %c0_i32_0 : i32, i32
  }
  func.func @transform_8(%arg0: i32) -> (i32, i32) {
    %c0_i32 = arith.constant 0 : i32
    %c0_i32_0 = arith.constant 0 : i32
    %c0_i32_1 = arith.constant 0 : i32
    return %c0_i32, %c0_i32_0 : i32, i32
  }
  func.func @transform_9(%arg0: i32) -> (i32, i32) {
    %c0_i32 = arith.constant 0 : i32
    %c0_i32_0 = arith.constant 0 : i32
    return %arg0, %c0_i32 : i32, i32
  }
}

</mosaic_0001>

<llo_original>
// kernel: actor_forward.1
$region0: #{actor_forward.1}
  #allocation0 [shape = 'u32[]', space=smem, size = 0x4, offset = 0x4, fixed_abs, tag = 'smem constant byte address 0x4 - core index']
  #allocation1 [shape = 'u32[144,128]{1,0:T(1,128)}', space=vmem, size = 0x12000, scoped, tag = 'internal scratch']
  %s0 = inlined_call_operand.vmem [shape: f32[8,128], index: 0, kind: input, shape index: {}]
  %s1 = inlined_call_operand.vmem [shape: bf16[128,128], index: 1, kind: input, shape index: {}]
  %s2 = inlined_call_operand.vmem [shape: f32[1,128], index: 2, kind: input, shape index: {}]
  %s3 = inlined_call_operand.vmem [shape: bf16[128,128], index: 3, kind: input, shape index: {}]
  %s4 = inlined_call_operand.vmem [shape: f32[1,128], index: 4, kind: input, shape index: {}]
  %s5 = inlined_call_operand.vmem [shape: bf16[128,128], index: 5, kind: input, shape index: {}]
  %s6 = inlined_call_operand.vmem [shape: f32[1,128], index: 6, kind: input, shape index: {}]
  %s7 = inlined_call_operand.vmem [shape: bf16[128,128], index: 7, kind: input, shape index: {}]
  %s8 = inlined_call_operand.vmem [shape: f32[1,128], index: 8, kind: input, shape index: {}]
  %s9 = inlined_call_operand.vmem [shape: f32[8,128], index: 9, kind: output, shape index: {}]
  %s10 = sld [smem:[#allocation0]]
  $region46: #{actor_forward.1} parent=0
    _
  %s12 = ssub.s32 1, %s10
  %s13 = scalar_select 0, %s12, %s10
  // Predicated region
  $region2: #{actor_forward.1} parent=0 // pred_check
    _
  $region3: #{actor_forward.1} parent=0 // pred_check_branch
    %15 = sbr.rel (0) target = $region5
  $region4: #{actor_forward.1} parent=0 // pred_region
    _
  $region5: #{actor_forward.1} parent=0 // pred_fallthru
    _
  // Predicated region
  $region6: #{actor_forward.1} parent=0 // pred_check
    _
  $region7: #{actor_forward.1} parent=0 // pred_check_branch
    %17 = sbr.rel (0) target = $region9
  $region8: #{actor_forward.1} parent=0 // pred_region
    _
  $region9: #{actor_forward.1} parent=0 // pred_fallthru
    _
  // Predicated region
  $region10: #{actor_forward.1} parent=0 // pred_check
    _
  $region11: #{actor_forward.1} parent=0 // pred_check_branch
    %19 = sbr.rel (0) target = $region13
  $region12: #{actor_forward.1} parent=0 // pred_region
    _
  $region13: #{actor_forward.1} parent=0 // pred_fallthru
    _
  // Predicated region
  $region14: #{actor_forward.1} parent=0 // pred_check
    _
  $region15: #{actor_forward.1} parent=0 // pred_check_branch
    %21 = sbr.rel (0) target = $region17
  $region16: #{actor_forward.1} parent=0 // pred_region
    _
  $region17: #{actor_forward.1} parent=0 // pred_fallthru
    _
  // Predicated region
  $region18: #{actor_forward.1} parent=0 // pred_check
    _
  $region19: #{actor_forward.1} parent=0 // pred_check_branch
    %23 = sbr.rel (0) target = $region21
  $region20: #{actor_forward.1} parent=0 // pred_region
    _
  $region21: #{actor_forward.1} parent=0 // pred_fallthru
    _
  // Predicated region
  $region22: #{actor_forward.1} parent=0 // pred_check
    _
  $region23: #{actor_forward.1} parent=0 // pred_check_branch
    %25 = sbr.rel (0) target = $region25
  $region24: #{actor_forward.1} parent=0 // pred_region
    _
  $region25: #{actor_forward.1} parent=0 // pred_fallthru
    _
  // Predicated region
  $region26: #{actor_forward.1} parent=0 // pred_check
    _
  $region27: #{actor_forward.1} parent=0 // pred_check_branch
    %27 = sbr.rel (0) target = $region29
  $region28: #{actor_forward.1} parent=0 // pred_region
    _
  $region29: #{actor_forward.1} parent=0 // pred_fallthru
    _
  // Predicated region
  $region30: #{actor_forward.1} parent=0 // pred_check
    _
  $region31: #{actor_forward.1} parent=0 // pred_check_branch
    %29 = sbr.rel (0) target = $region33
  $region32: #{actor_forward.1} parent=0 // pred_region
    _
  $region33: #{actor_forward.1} parent=0 // pred_fallthru
    _
  // Predicated region
  $region34: #{actor_forward.1} parent=0 // pred_check
    _
  $region35: #{actor_forward.1} parent=0 // pred_check_branch
    %31 = sbr.rel (0) target = $region37
  $region36: #{actor_forward.1} parent=0 // pred_region
    _
  $region37: #{actor_forward.1} parent=0 // pred_fallthru
    _
  %v33 = vld [vmem:[%s0] sm:$0xff]
  %v34 = vpack.c.bf16 %v33, %v33
  %v35 = vld [vmem:[%s1] sm:$0xf]
  %v36 = vld [vmem:[%s1 + $0x4] sm:$0xf]
  %v37 = vld [vmem:[%s1 + $0x8] sm:$0xf]
  %v38 = vld [vmem:[%s1 + $0xc] sm:$0xf]
  %v39 = vld [vmem:[%s1 + $0x10] sm:$0xf]
  %v40 = vld [vmem:[%s1 + $0x14] sm:$0xf]
  %v41 = vld [vmem:[%s1 + $0x18] sm:$0xf]
  %v42 = vld [vmem:[%s1 + $0x1c] sm:$0xf]
  %v43 = vld [vmem:[%s1 + $0x20] sm:$0xf]
  %v44 = vld [vmem:[%s1 + $0x24] sm:$0xf]
  %v45 = vld [vmem:[%s1 + $0x28] sm:$0xf]
  %v46 = vld [vmem:[%s1 + $0x2c] sm:$0xf]
  %v47 = vld [vmem:[%s1 + $0x30] sm:$0xf]
  %v48 = vld [vmem:[%s1 + $0x34] sm:$0xf]
  %v49 = vld [vmem:[%s1 + $0x38] sm:$0xf]
  %v50 = vld [vmem:[%s1 + $0x3c] sm:$0xf]
  %v51 = vld [vmem:[%s2] sm:$0x1]
  %v53 = vlaneseq
  %v54 = vshrl.u32 %v53, 7
  %v55 = vsub.s32 0, %v54
  %v56 = vrot.slane %v51, %v55
  %v74 = vunpack.c.l.b16 %v35
  %v75 = vunpack.c.l.b16 %v36
  %v76 = vunpack.c.l.b16 %v37
  %v77 = vunpack.c.l.b16 %v38
  %v78 = vunpack.c.l.b16 %v39
  %v79 = vunpack.c.l.b16 %v40
  %v80 = vunpack.c.l.b16 %v41
  %v81 = vunpack.c.l.b16 %v42
  %v82 = vunpack.c.l.b16 %v43
  %v83 = vunpack.c.l.b16 %v44
  %v84 = vunpack.c.l.b16 %v45
  %v85 = vunpack.c.l.b16 %v46
  %v86 = vunpack.c.l.b16 %v47
  %v87 = vunpack.c.l.b16 %v48
  %v88 = vunpack.c.l.b16 %v49
  %v89 = vunpack.c.l.b16 %v50
  %v90 = vpack.c.b16 %v75, %v74
  %v91 = vpack.c.b16 %v77, %v76
  %v92 = vpack.c.b16 %v79, %v78
  %v93 = vpack.c.b16 %v81, %v80
  %v94 = vpack.c.b16 %v83, %v82
  %v95 = vpack.c.b16 %v85, %v84
  %v96 = vpack.c.b16 %v87, %v86
  %v97 = vpack.c.b16 %v89, %v88
  %106 = vmatprep.subr.bf16.mxu0 0
  %107 = vmatpush1.bf16.msra.mxu0 %v97
  %108 = vmatprep.subr.bf16.mxu0 0
  %109 = vmatpush1.bf16.msra.mxu0 %v96
  %110 = vmatprep.subr.bf16.mxu0 0
  %111 = vmatpush1.bf16.msra.mxu0 %v95
  %112 = vmatprep.subr.bf16.mxu0 0
  %113 = vmatpush1.bf16.msra.mxu0 %v94
  %114 = vmatprep.subr.bf16.mxu0 0
  %115 = vmatpush1.bf16.msra.mxu0 %v93
  %116 = vmatprep.subr.bf16.mxu0 0
  %117 = vmatpush1.bf16.msra.mxu0 %v92
  %118 = vmatprep.subr.bf16.mxu0 0
  %119 = vmatpush1.bf16.msra.mxu0 %v91
  %120 = vmatprep.subr.bf16.mxu0 0
  %121 = vmatpush1.bf16.msra.mxu0 %v90
  %122 = vmatprep.subr.bf16.mxu0 0
  %123 = vmatpush2.bf16.msra.mxu0 0
  %124 = vmatprep.subr.bf16.mxu0 0
  %125 = vmatpush2.bf16.msra.mxu0 0
  %126 = vmatprep.subr.bf16.mxu0 0
  %127 = vmatpush2.bf16.msra.mxu0 0
  %128 = vmatprep.subr.bf16.mxu0 0
  %129 = vmatpush2.bf16.msra.mxu0 0
  %130 = vmatprep.subr.bf16.mxu0 0
  %131 = vmatpush2.bf16.msra.mxu0 0
  %132 = vmatprep.subr.bf16.mxu0 0
  %133 = vmatpush2.bf16.msra.mxu0 0
  %134 = vmatprep.subr.bf16.mxu0 0
  %135 = vmatpush2.bf16.msra.mxu0 0
  %136 = vmatprep.subr.bf16.mxu0 0
  %137 = vmatpush2.bf16.msra.mxu0 0
  %138 = vmatprep.mubr.bf16.mxu0 0
  %139 = vmatmul.mubr.bf16.gmra.mxu0 %v34
  %v140 = vpop.f32.mrf.mxu0
  %v141 = vadd.f32 %v56, %v140
  %v142 = vpop.f32.mrf.mxu0
  %v143 = vpop.f32.mrf.mxu0
  %v144 = vpop.f32.mrf.mxu0
  %145 = vdwg.mxu0
  %v146 = vmax.f32 %v141, 0.0
  %v147 = vpack.c.bf16 %v146, %v146
  %v148 = vld [vmem:[%s3] sm:$0xf]
  %v149 = vld [vmem:[%s3 + $0x4] sm:$0xf]
  %v150 = vld [vmem:[%s3 + $0x8] sm:$0xf]
  %v151 = vld [vmem:[%s3 + $0xc] sm:$0xf]
  %v152 = vld [vmem:[%s3 + $0x10] sm:$0xf]
  %v153 = vld [vmem:[%s3 + $0x14] sm:$0xf]
  %v154 = vld [vmem:[%s3 + $0x18] sm:$0xf]
  %v155 = vld [vmem:[%s3 + $0x1c] sm:$0xf]
  %v156 = vld [vmem:[%s3 + $0x20] sm:$0xf]
  %v157 = vld [vmem:[%s3 + $0x24] sm:$0xf]
  %v158 = vld [vmem:[%s3 + $0x28] sm:$0xf]
  %v159 = vld [vmem:[%s3 + $0x2c] sm:$0xf]
  %v160 = vld [vmem:[%s3 + $0x30] sm:$0xf]
  %v161 = vld [vmem:[%s3 + $0x34] sm:$0xf]
  %v162 = vld [vmem:[%s3 + $0x38] sm:$0xf]
  %v163 = vld [vmem:[%s3 + $0x3c] sm:$0xf]
  %v164 = vld [vmem:[%s4] sm:$0x1]
  %v166 = vlaneseq
  %v167 = vshrl.u32 %v166, 7
  %v168 = vsub.s32 0, %v167
  %v169 = vrot.slane %v164, %v168
  %v187 = vunpack.c.l.b16 %v148
  %v188 = vunpack.c.l.b16 %v149
  %v189 = vunpack.c.l.b16 %v150
  %v190 = vunpack.c.l.b16 %v151
  %v191 = vunpack.c.l.b16 %v152
  %v192 = vunpack.c.l.b16 %v153
  %v193 = vunpack.c.l.b16 %v154
  %v194 = vunpack.c.l.b16 %v155
  %v195 = vunpack.c.l.b16 %v156
  %v196 = vunpack.c.l.b16 %v157
  %v197 = vunpack.c.l.b16 %v158
  %v198 = vunpack.c.l.b16 %v159
  %v199 = vunpack.c.l.b16 %v160
  %v200 = vunpack.c.l.b16 %v161
  %v201 = vunpack.c.l.b16 %v162
  %v202 = vunpack.c.l.b16 %v163
  %v203 = vpack.c.b16 %v188, %v187
  %v204 = vpack.c.b16 %v190, %v189
  %v205 = vpack.c.b16 %v192, %v191
  %v206 = vpack.c.b16 %v194, %v193
  %v207 = vpack.c.b16 %v196, %v195
  %v208 = vpack.c.b16 %v198, %v197
  %v209 = vpack.c.b16 %v200, %v199
  %v210 = vpack.c.b16 %v202, %v201
  %219 = vmatprep.subr.bf16.mxu0 0
  %220 = vmatpush1.bf16.msra.mxu0 %v210
  %221 = vmatprep.subr.bf16.mxu0 0
  %222 = vmatpush1.bf16.msra.mxu0 %v209
  %223 = vmatprep.subr.bf16.mxu0 0
  %224 = vmatpush1.bf16.msra.mxu0 %v208
  %225 = vmatprep.subr.bf16.mxu0 0
  %226 = vmatpush1.bf16.msra.mxu0 %v207
  %227 = vmatprep.subr.bf16.mxu0 0
  %228 = vmatpush1.bf16.msra.mxu0 %v206
  %229 = vmatprep.subr.bf16.mxu0 0
  %230 = vmatpush1.bf16.msra.mxu0 %v205
  %231 = vmatprep.subr.bf16.mxu0 0
  %232 = vmatpush1.bf16.msra.mxu0 %v204
  %233 = vmatprep.subr.bf16.mxu0 0
  %234 = vmatpush1.bf16.msra.mxu0 %v203
  %235 = vmatprep.subr.bf16.mxu0 0
  %236 = vmatpush2.bf16.msra.mxu0 0
  %237 = vmatprep.subr.bf16.mxu0 0
  %238 = vmatpush2.bf16.msra.mxu0 0
  %239 = vmatprep.subr.bf16.mxu0 0
  %240 = vmatpush2.bf16.msra.mxu0 0
  %241 = vmatprep.subr.bf16.mxu0 0
  %242 = vmatpush2.bf16.msra.mxu0 0
  %243 = vmatprep.subr.bf16.mxu0 0
  %244 = vmatpush2.bf16.msra.mxu0 0
  %245 = vmatprep.subr.bf16.mxu0 0
  %246 = vmatpush2.bf16.msra.mxu0 0
  %247 = vmatprep.subr.bf16.mxu0 0
  %248 = vmatpush2.bf16.msra.mxu0 0
  %249 = vmatprep.subr.bf16.mxu0 0
  %250 = vmatpush2.bf16.msra.mxu0 0
  %251 = vmatprep.mubr.bf16.mxu0 0
  %252 = vmatmul.mubr.bf16.gmra.mxu0 %v147
  %v253 = vpop.f32.mrf.mxu0
  %v254 = vadd.f32 %v169, %v253
  %v255 = vpop.f32.mrf.mxu0
  %v256 = vpop.f32.mrf.mxu0
  %v257 = vpop.f32.mrf.mxu0
  %258 = vdwg.mxu0
  %v259 = vmax.f32 %v254, 0.0
  %v260 = vpack.c.bf16 %v259, %v259
  %v261 = vld [vmem:[%s5] sm:$0xf]
  %v262 = vld [vmem:[%s5 + $0x4] sm:$0xf]
  %v263 = vld [vmem:[%s5 + $0x8] sm:$0xf]
  %v264 = vld [vmem:[%s5 + $0xc] sm:$0xf]
  %v265 = vld [vmem:[%s5 + $0x10] sm:$0xf]
  %v266 = vld [vmem:[%s5 + $0x14] sm:$0xf]
  %v267 = vld [vmem:[%s5 + $0x18] sm:$0xf]
  %v268 = vld [vmem:[%s5 + $0x1c] sm:$0xf]
  %v269 = vld [vmem:[%s5 + $0x20] sm:$0xf]
  %v270 = vld [vmem:[%s5 + $0x24] sm:$0xf]
  %v271 = vld [vmem:[%s5 + $0x28] sm:$0xf]
  %v272 = vld [vmem:[%s5 + $0x2c] sm:$0xf]
  %v273 = vld [vmem:[%s5 + $0x30] sm:$0xf]
  %v274 = vld [vmem:[%s5 + $0x34] sm:$0xf]
  %v275 = vld [vmem:[%s5 + $0x38] sm:$0xf]
  %v276 = vld [vmem:[%s5 + $0x3c] sm:$0xf]
  %v277 = vld [vmem:[%s6] sm:$0x1]
  %v279 = vlaneseq
  %v280 = vshrl.u32 %v279, 7
  %v281 = vsub.s32 0, %v280
  %v282 = vrot.slane %v277, %v281
  %v300 = vunpack.c.l.b16 %v261
  %v301 = vunpack.c.l.b16 %v262
  %v302 = vunpack.c.l.b16 %v263
  %v303 = vunpack.c.l.b16 %v264
  %v304 = vunpack.c.l.b16 %v265
  %v305 = vunpack.c.l.b16 %v266
  %v306 = vunpack.c.l.b16 %v267
  %v307 = vunpack.c.l.b16 %v268
  %v308 = vunpack.c.l.b16 %v269
  %v309 = vunpack.c.l.b16 %v270
  %v310 = vunpack.c.l.b16 %v271
  %v311 = vunpack.c.l.b16 %v272
  %v312 = vunpack.c.l.b16 %v273
  %v313 = vunpack.c.l.b16 %v274
  %v314 = vunpack.c.l.b16 %v275
  %v315 = vunpack.c.l.b16 %v276
  %v316 = vpack.c.b16 %v301, %v300
  %v317 = vpack.c.b16 %v303, %v302
  %v318 = vpack.c.b16 %v305, %v304
  %v319 = vpack.c.b16 %v307, %v306
  %v320 = vpack.c.b16 %v309, %v308
  %v321 = vpack.c.b16 %v311, %v310
  %v322 = vpack.c.b16 %v313, %v312
  %v323 = vpack.c.b16 %v315, %v314
  %332 = vmatprep.subr.bf16.mxu0 0
  %333 = vmatpush1.bf16.msra.mxu0 %v323
  %334 = vmatprep.subr.bf16.mxu0 0
  %335 = vmatpush1.bf16.msra.mxu0 %v322
  %336 = vmatprep.subr.bf16.mxu0 0
  %337 = vmatpush1.bf16.msra.mxu0 %v321
  %338 = vmatprep.subr.bf16.mxu0 0
  %339 = vmatpush1.bf16.msra.mxu0 %v320
  %340 = vmatprep.subr.bf16.mxu0 0
  %341 = vmatpush1.bf16.msra.mxu0 %v319
  %342 = vmatprep.subr.bf16.mxu0 0
  %343 = vmatpush1.bf16.msra.mxu0 %v318
  %344 = vmatprep.subr.bf16.mxu0 0
  %345 = vmatpush1.bf16.msra.mxu0 %v317
  %346 = vmatprep.subr.bf16.mxu0 0
  %347 = vmatpush1.bf16.msra.mxu0 %v316
  %348 = vmatprep.subr.bf16.mxu0 0
  %349 = vmatpush2.bf16.msra.mxu0 0
  %350 = vmatprep.subr.bf16.mxu0 0
  %351 = vmatpush2.bf16.msra.mxu0 0
  %352 = vmatprep.subr.bf16.mxu0 0
  %353 = vmatpush2.bf16.msra.mxu0 0
  %354 = vmatprep.subr.bf16.mxu0 0
  %355 = vmatpush2.bf16.msra.mxu0 0
  %356 = vmatprep.subr.bf16.mxu0 0
  %357 = vmatpush2.bf16.msra.mxu0 0
  %358 = vmatprep.subr.bf16.mxu0 0
  %359 = vmatpush2.bf16.msra.mxu0 0
  %360 = vmatprep.subr.bf16.mxu0 0
  %361 = vmatpush2.bf16.msra.mxu0 0
  %362 = vmatprep.subr.bf16.mxu0 0
  %363 = vmatpush2.bf16.msra.mxu0 0
  %364 = vmatprep.mubr.bf16.mxu0 0
  %365 = vmatmul.mubr.bf16.gmra.mxu0 %v260
  %v366 = vpop.f32.mrf.mxu0
  %v367 = vadd.f32 %v282, %v366
  %v368 = vpop.f32.mrf.mxu0
  %v369 = vpop.f32.mrf.mxu0
  %v370 = vpop.f32.mrf.mxu0
  %371 = vdwg.mxu0
  %v372 = vadd.f32 %v367, 3.0
  %v373 = vmax.f32 %v372, 0.0
  %v374 = vmin.f32 %v373, 6.0
  %v375 = vmul.f32 %v367, %v374
  %v376 = vmul.f32 %v375, 0.16666667
  %v377 = vpack.c.bf16 %v376, %v376
  %v378 = vld [vmem:[%s7] sm:$0xf]
  %v379 = vld [vmem:[%s7 + $0x4] sm:$0xf]
  %v380 = vld [vmem:[%s7 + $0x8] sm:$0xf]
  %v381 = vld [vmem:[%s7 + $0xc] sm:$0xf]
  %v382 = vld [vmem:[%s7 + $0x10] sm:$0xf]
  %v383 = vld [vmem:[%s7 + $0x14] sm:$0xf]
  %v384 = vld [vmem:[%s7 + $0x18] sm:$0xf]
  %v385 = vld [vmem:[%s7 + $0x1c] sm:$0xf]
  %v386 = vld [vmem:[%s7 + $0x20] sm:$0xf]
  %v387 = vld [vmem:[%s7 + $0x24] sm:$0xf]
  %v388 = vld [vmem:[%s7 + $0x28] sm:$0xf]
  %v389 = vld [vmem:[%s7 + $0x2c] sm:$0xf]
  %v390 = vld [vmem:[%s7 + $0x30] sm:$0xf]
  %v391 = vld [vmem:[%s7 + $0x34] sm:$0xf]
  %v392 = vld [vmem:[%s7 + $0x38] sm:$0xf]
  %v393 = vld [vmem:[%s7 + $0x3c] sm:$0xf]
  %v394 = vld [vmem:[%s8] sm:$0x1]
  %v396 = vlaneseq
  %v397 = vshrl.u32 %v396, 7
  %v398 = vsub.s32 0, %v397
  %v399 = vrot.slane %v394, %v398
  %v417 = vunpack.c.l.b16 %v378
  %v418 = vunpack.c.l.b16 %v379
  %v419 = vunpack.c.l.b16 %v380
  %v420 = vunpack.c.l.b16 %v381
  %v421 = vunpack.c.l.b16 %v382
  %v422 = vunpack.c.l.b16 %v383
  %v423 = vunpack.c.l.b16 %v384
  %v424 = vunpack.c.l.b16 %v385
  %v425 = vunpack.c.l.b16 %v386
  %v426 = vunpack.c.l.b16 %v387
  %v427 = vunpack.c.l.b16 %v388
  %v428 = vunpack.c.l.b16 %v389
  %v429 = vunpack.c.l.b16 %v390
  %v430 = vunpack.c.l.b16 %v391
  %v431 = vunpack.c.l.b16 %v392
  %v432 = vunpack.c.l.b16 %v393
  %v433 = vpack.c.b16 %v418, %v417
  %v434 = vpack.c.b16 %v420, %v419
  %v435 = vpack.c.b16 %v422, %v421
  %v436 = vpack.c.b16 %v424, %v423
  %v437 = vpack.c.b16 %v426, %v425
  %v438 = vpack.c.b16 %v428, %v427
  %v439 = vpack.c.b16 %v430, %v429
  %v440 = vpack.c.b16 %v432, %v431
  %449 = vmatprep.subr.bf16.mxu0 0
  %450 = vmatpush1.bf16.msra.mxu0 %v440
  %451 = vmatprep.subr.bf16.mxu0 0
  %452 = vmatpush1.bf16.msra.mxu0 %v439
  %453 = vmatprep.subr.bf16.mxu0 0
  %454 = vmatpush1.bf16.msra.mxu0 %v438
  %455 = vmatprep.subr.bf16.mxu0 0
  %456 = vmatpush1.bf16.msra.mxu0 %v437
  %457 = vmatprep.subr.bf16.mxu0 0
  %458 = vmatpush1.bf16.msra.mxu0 %v436
  %459 = vmatprep.subr.bf16.mxu0 0
  %460 = vmatpush1.bf16.msra.mxu0 %v435
  %461 = vmatprep.subr.bf16.mxu0 0
  %462 = vmatpush1.bf16.msra.mxu0 %v434
  %463 = vmatprep.subr.bf16.mxu0 0
  %464 = vmatpush1.bf16.msra.mxu0 %v433
  %465 = vmatprep.subr.bf16.mxu0 0
  %466 = vmatpush2.bf16.msra.mxu0 0
  %467 = vmatprep.subr.bf16.mxu0 0
  %468 = vmatpush2.bf16.msra.mxu0 0
  %469 = vmatprep.subr.bf16.mxu0 0
  %470 = vmatpush2.bf16.msra.mxu0 0
  %471 = vmatprep.subr.bf16.mxu0 0
  %472 = vmatpush2.bf16.msra.mxu0 0
  %473 = vmatprep.subr.bf16.mxu0 0
  %474 = vmatpush2.bf16.msra.mxu0 0
  %475 = vmatprep.subr.bf16.mxu0 0
  %476 = vmatpush2.bf16.msra.mxu0 0
  %477 = vmatprep.subr.bf16.mxu0 0
  %478 = vmatpush2.bf16.msra.mxu0 0
  %479 = vmatprep.subr.bf16.mxu0 0
  %480 = vmatpush2.bf16.msra.mxu0 0
  %481 = vmatprep.mubr.bf16.mxu0 0
  %482 = vmatmul.mubr.bf16.gmra.mxu0 %v377
  %v483 = vpop.f32.mrf.mxu0
  %v484 = vadd.f32 %v399, %v483
  %v485 = vpop.f32.mrf.mxu0
  %v486 = vpop.f32.mrf.mxu0
  %v487 = vpop.f32.mrf.mxu0
  %488 = vdwg.mxu0
  %v489 = vtanh.pop %v484
  %490 = vst [vmem:[%s9] sm:$0xff] %v489
  // Predicated region
  $region38: #{actor_forward.1} parent=0 // pred_check
    _
  $region39: #{actor_forward.1} parent=0 // pred_check_branch
    %492 = sbr.rel (0) target = $region41
  $region40: #{actor_forward.1} parent=0 // pred_region
    _
  $region41: #{actor_forward.1} parent=0 // pred_fallthru
    _
  // Predicated region
  $region42: #{actor_forward.1} parent=0 // pred_check
    _
  $region43: #{actor_forward.1} parent=0 // pred_check_branch
    %494 = sbr.rel (0) target = $region45
  $region44: #{actor_forward.1} parent=0 // pred_region
    _
  $region45: #{actor_forward.1} parent=0 // pred_fallthru
    _

</llo_original>
